<compile_context>
chip_gen: v7x
topology: tpu7x:2x2x1
jax: 0.10.0
libtpu: 0.0.40
codegen_flags: <defaults>
</compile_context>

<pallas_src>
import functools

import jax
import jax.numpy as jnp
from jax.experimental import pallas as pl
from jax.experimental.pallas import tpu as pltpu


# ----------------------------------------------------------------------------
# Kernel
# ----------------------------------------------------------------------------
def _bias_relu(h_f32, bias_f32, bf16_tail):
    """bias add + ReLU, returning bf16 for the next MXU matmul."""
    if bf16_tail:
        h = h_f32.astype(jnp.bfloat16)
        return jnp.maximum(h + bias_f32.astype(jnp.bfloat16), 0.0)
    return jnp.maximum(h_f32 + bias_f32, 0.0).astype(jnp.bfloat16)


def mlp_kernel(idx_ref, g1_ref, b1_ref, w2_ref, b2_ref, w3_ref, b3_ref,
               wo_ref, bo_ref, out_ref, *, bf16_tail):
    # idx_ref: (1, TILE_B) int32 item indices, batch on the lane axis.
    idx = idx_ref[...]
    tile_b = idx.shape[1]
    n_items = g1_ref.shape[1]

    # In-kernel gather + fc1(item half) fused: one-hot(num_items, TILE_B) on the
    # MXU against G1 = W1_item @ emb.T  (user half already folded into b1).
    iota = jax.lax.broadcasted_iota(jnp.int32, (n_items, tile_b), 0)
    onehot = (iota == idx).astype(jnp.bfloat16)                  # (items, TILE_B)

    h = jnp.dot(g1_ref[...], onehot, preferred_element_type=jnp.float32)
    h = _bias_relu(h, b1_ref[...], bf16_tail)                    # (h1, TILE_B)

    h = jnp.dot(w2_ref[...], h, preferred_element_type=jnp.float32)
    h = _bias_relu(h, b2_ref[...], bf16_tail)                    # (h2, TILE_B)

    h = jnp.dot(w3_ref[...], h, preferred_element_type=jnp.float32)
    h = _bias_relu(h, b3_ref[...], bf16_tail)                    # (h3, TILE_B)

    logits = jnp.dot(wo_ref[...], h,
                     preferred_element_type=jnp.float32) + bo_ref[...]  # (1, TILE_B)

    # sigmoid: exp and reciprocal both on the EUP slot.
    t = jnp.exp(-logits)
    out_ref[...] = pl.reciprocal(1.0 + t, approx=True)


# ----------------------------------------------------------------------------
# Wrapper
# ----------------------------------------------------------------------------
def init_params(key, num_items, latent_dim, layers):
    """PyTorch-faithful layout: Linear weight (out, in), bias (out,)."""
    keys = jax.random.split(key, 2 + 2 * len(layers))
    p = {}
    p["embedding_user"] = jax.random.normal(keys[0], (1, latent_dim), jnp.float32)
    p["embedding_item"] = jax.random.normal(keys[1], (num_items, latent_dim),
                                            jnp.float32)
    dims = list(zip(layers[:-1], layers[1:])) + [(layers[-1], 1)]
    names = [f"{i + 1}" for i in range(len(layers) - 1)] + ["o"]
    for n, (d_in, d_out), kw, kb in zip(names, dims, keys[2::2], keys[3::2]):
        scale = 1.0 / float(d_in) ** 0.5
        p[f"w{n}"] = jax.random.uniform(kw, (d_out, d_in), jnp.float32,
                                        -scale, scale)
        p[f"b{n}"] = jax.random.uniform(kb, (d_out,), jnp.float32, -scale, scale)
    return p


def prepare_mlp_params(params):
    """One-time (per-parameter-update) prep, hoisted out of the forward path."""
    latent = params["embedding_user"].shape[1]
    w1 = params["w1"]                                   # (h1, 2*latent)
    user_vec = params["embedding_user"][0]              # (latent,)
    # Fold the constant user half of fc1 into an effective bias (exact, f32).
    b1_eff = w1[:, :latent] @ user_vec + params["b1"]   # (h1,)
    # Fold fc1's item half through the embedding table: G1[:, j] = W1_item @ emb[j].
    g1 = (w1[:, latent:] @ params["embedding_item"].T).astype(jnp.bfloat16)
    return dict(
        g1=g1,                                          # (h1, num_items) bf16
        b1=b1_eff.astype(jnp.float32)[:, None],         # (h1, 1)
        w2=params["w2"].astype(jnp.bfloat16),
        b2=params["b2"].astype(jnp.float32)[:, None],
        w3=params["w3"].astype(jnp.bfloat16),
        b3=params["b3"].astype(jnp.float32)[:, None],
        wo=params["wo"].astype(jnp.bfloat16),
        bo=params["bo"].astype(jnp.float32)[:, None],
    )


def _round_up(x, m):
    return (x + m - 1) // m * m


def _choose_tile(batch, max_tile):
    """Pick (tile_b, b_pad): big tiles, >=2 grid steps when possible, low padding."""
    b_min = _round_up(batch, 128)
    if b_min <= 2 * max_tile:
        if b_min < 512:                       # tiny batch: one small tile
            return b_min, b_min
        t = _round_up((b_min + 1) // 2, 128)  # exactly 2 tiles -> both v7x TCs busy
        return t, 2 * t
    # Large batch: pick the candidate tile minimising padding (prefer bigger).
    best_t, best_pad = max_tile, _round_up(batch, max_tile)
    for t in (max_tile // 2, max_tile // 4, max_tile // 8):
        pad = _round_up(batch, t)
        if pad < best_pad:
            best_t, best_pad = t, pad
    return best_t, best_pad


def _has_bf16_vpu():
    """bf16 VALU exists on v6e/v7x; keep the f32 tail on v5e and older."""
    try:
        kind = jax.devices()[0].device_kind.lower()
        return ("v6" in kind) or ("v7" in kind)
    except Exception:
        return False


def mlp_forward(item_indices, prep, *, max_tile=16384, bf16_tail=None):
    B = int(item_indices.shape[0])
    if bf16_tail is None:
        bf16_tail = _has_bf16_vpu()

    tile_b, b_pad = _choose_tile(B, max_tile)
    grid = (b_pad // tile_b,)

    idx = item_indices.astype(jnp.int32)
    if b_pad != B:
        idx = jnp.concatenate([idx, jnp.zeros((b_pad - B,), jnp.int32)])
    idx2 = idx.reshape(1, b_pad)                        # batch on the lane axis

    g1, w2, w3, wo = prep["g1"], prep["w2"], prep["w3"], prep["wo"]
    b1, b2, b3, bo = prep["b1"], prep["b2"], prep["b3"], prep["bo"]
    h1, n_items = g1.shape
    h2, h3 = w2.shape[0], w3.shape[0]

    def const(arr):                                     # full array, fetched once
        return pl.BlockSpec(arr.shape, lambda i: (0, 0))

    flops = 2 * b_pad * (n_items * h1 + h1 * h2 + h2 * h3 + h3)
    weight_bytes = (2 * (h1 * n_items + h2 * h1 + h3 * h2 + h3)
                    + 4 * (h1 + h2 + h3 + 1))
    bytes_accessed = 4 * b_pad + 4 * b_pad + weight_bytes   # idx in + f32 out

    kernel = functools.partial(mlp_kernel, bf16_tail=bf16_tail)

    out = pl.pallas_call(
        kernel,
        out_shape=jax.ShapeDtypeStruct((1, b_pad), jnp.float32),
        grid_spec=pltpu.PrefetchScalarGridSpec(
            num_scalar_prefetch=0,
            grid=grid,
            in_specs=[
                pl.BlockSpec((1, tile_b), lambda i: (0, i)),   # item indices
                const(g1), const(b1),
                const(w2), const(b2),
                const(w3), const(b3),
                const(wo), const(bo),
            ],
            out_specs=pl.BlockSpec((1, tile_b), lambda i: (0, i)),
        ),
        compiler_params=pltpu.CompilerParams(
            dimension_semantics=("parallel",),
            vmem_limit_bytes=32 * 1024 * 1024),
        cost_estimate=pl.CostEstimate(
            flops=flops, transcendentals=b_pad, bytes_accessed=bytes_accessed),
    )(idx2, g1, b1, w2, b2, w3, b3, wo, bo)

    return out[0, :B].reshape(B, 1)


# ----------------------------------------------------------------------------
# Reference + test
# ----------------------------------------------------------------------------
def mlp_forward_ref(item_indices, params):
    # pure-JAX f32 reference, faithful to the PyTorch math
    B = item_indices.shape[0]
    latent = params["embedding_user"].shape[1]
    user = jnp.broadcast_to(params["embedding_user"], (B, latent))
    item = jnp.take(params["embedding_item"], item_indices, axis=0)
    v = jnp.concatenate([user, item], axis=-1)
    for i in range(1, 4):
        v = jnp.maximum(v @ params[f"w{i}"].T + params[f"b{i}"], 0.0)
    logits = v @ params["wo"].T + params["bo"]
    return jax.nn.sigmoid(logits)


if __name__ == "__main__":
    # config consistent with the module: layers[0] == 2 * latent_dim
    config = dict(num_users=4, num_items=64, latent_dim=16, layers=[32, 32, 16, 8])

    key = jax.random.PRNGKey(0)
    pkey, ikey = jax.random.split(key)
    params = init_params(pkey, config["num_items"], config["latent_dim"],
                         config["layers"])
    prep = prepare_mlp_params(params)     # hoisted one-time parameter prep

    batch = 8
    item_indices = jax.random.randint(ikey, (batch,), 0, config["num_items"],
                                      dtype=jnp.int32)

    rating = mlp_forward(item_indices, prep)
    rating = jax.block_until_ready(rating)

    ref = mlp_forward_ref(item_indices, params)
    assert rating.shape == (batch, 1)
    # kernel runs hidden layers in bf16 (f32 accumulate) + approx reciprocal
    assert jnp.allclose(rating, ref, atol=2e-2, rtol=1e-5)

    print("KERNEL_OK")
</pallas_src>

<mosaic_0001>
module attributes {stable_mosaic.version = 11 : i64} {
  func.func @mlp_kernel(%arg0: i32, %arg1: memref<1x128xi32, #tpu.memory_space<vmem>>, %arg2: memref<32x64xbf16, #tpu.memory_space<vmem>>, %arg3: memref<32x1xf32, #tpu.memory_space<vmem>>, %arg4: memref<16x32xbf16, #tpu.memory_space<vmem>>, %arg5: memref<16x1xf32, #tpu.memory_space<vmem>>, %arg6: memref<8x16xbf16, #tpu.memory_space<vmem>>, %arg7: memref<8x1xf32, #tpu.memory_space<vmem>>, %arg8: memref<1x8xbf16, #tpu.memory_space<vmem>>, %arg9: memref<1x1xf32, #tpu.memory_space<vmem>>, %arg10: memref<1x128xf32, #tpu.memory_space<vmem>>) attributes {dimension_semantics = [#tpu.dimension_semantics<parallel>], iteration_bounds = array<i64: 1>, scalar_prefetch = 0 : i64, scratch_operands = 0 : i64, tpu.core_type = #tpu.core_type<tc>, window_params = [{transform_indices = @transform_0, window_bounds = array<i64: 1, 128>}, {pipeline_mode = #tpu.pipeline_mode<synchronous>, transform_indices = @transform_1, window_bounds = array<i64: 32, 64>}, {pipeline_mode = #tpu.pipeline_mode<synchronous>, transform_indices = @transform_2, window_bounds = array<i64: 32, 1>}, {pipeline_mode = #tpu.pipeline_mode<synchronous>, transform_indices = @transform_3, window_bounds = array<i64: 16, 32>}, {pipeline_mode = #tpu.pipeline_mode<synchronous>, transform_indices = @transform_4, window_bounds = array<i64: 16, 1>}, {pipeline_mode = #tpu.pipeline_mode<synchronous>, transform_indices = @transform_5, window_bounds = array<i64: 8, 16>}, {pipeline_mode = #tpu.pipeline_mode<synchronous>, transform_indices = @transform_6, window_bounds = array<i64: 8, 1>}, {pipeline_mode = #tpu.pipeline_mode<synchronous>, transform_indices = @transform_7, window_bounds = array<i64: 1, 8>}, {pipeline_mode = #tpu.pipeline_mode<synchronous>, transform_indices = @transform_8, window_bounds = array<i64: 1, 1>}, {transform_indices = @transform_9, window_bounds = array<i64: 1, 128>}]} {
    %c0 = arith.constant 0 : index
    %c0_0 = arith.constant 0 : index
    %0 = vector.load %arg1[%c0, %c0_0] : memref<1x128xi32, #tpu.memory_space<vmem>>, vector<1x128xi32>
    %1 = tpu.iota {dimensions = array<i32: 0>} : vector<64x128xi32>
    %2 = vector.broadcast %0 : vector<1x128xi32> to vector<64x128xi32>
    %3 = arith.cmpi eq, %1, %2 : vector<64x128xi32>
    %4 = arith.extui %3 : vector<64x128xi1> to vector<64x128xi32>
    %5 = arith.sitofp %4 : vector<64x128xi32> to vector<64x128xf32>
    %6 = arith.truncf %5 : vector<64x128xf32> to vector<64x128xbf16>
    %c0_1 = arith.constant 0 : index
    %c0_2 = arith.constant 0 : index
    %7 = vector.load %arg2[%c0_1, %c0_2] : memref<32x64xbf16, #tpu.memory_space<vmem>>, vector<32x64xbf16>
    %cst = arith.constant dense<0.000000e+00> : vector<32x128xf32>
    %8 = tpu.matmul %7, %6, %cst {dimension_numbers = #tpu.dot_dimension_numbers<[1], [0], [0], [1], [0, 0, 1, 1], [], []>} : vector<32x64xbf16>, vector<64x128xbf16>, vector<32x128xf32> -> vector<32x128xf32>
    %c0_3 = arith.constant 0 : index
    %c0_4 = arith.constant 0 : index
    %9 = vector.load %arg3[%c0_3, %c0_4] : memref<32x1xf32, #tpu.memory_space<vmem>>, vector<32x1xf32>
    %10 = vector.broadcast %9 : vector<32x1xf32> to vector<32x128xf32>
    %11 = arith.addf %8, %10 : vector<32x128xf32>
    %cst_5 = arith.constant 0.000000e+00 : f32
    %12 = vector.broadcast %cst_5 : f32 to vector<32x128xf32>
    %13 = arith.maximumf %11, %12 : vector<32x128xf32>
    %14 = arith.truncf %13 : vector<32x128xf32> to vector<32x128xbf16>
    %c0_6 = arith.constant 0 : index
    %c0_7 = arith.constant 0 : index
    %15 = vector.load %arg4[%c0_6, %c0_7] : memref<16x32xbf16, #tpu.memory_space<vmem>>, vector<16x32xbf16>
    %cst_8 = arith.constant dense<0.000000e+00> : vector<16x128xf32>
    %16 = tpu.matmul %15, %14, %cst_8 {dimension_numbers = #tpu.dot_dimension_numbers<[1], [0], [0], [1], [0, 0, 1, 1], [], []>} : vector<16x32xbf16>, vector<32x128xbf16>, vector<16x128xf32> -> vector<16x128xf32>
    %c0_9 = arith.constant 0 : index
    %c0_10 = arith.constant 0 : index
    %17 = vector.load %arg5[%c0_9, %c0_10] : memref<16x1xf32, #tpu.memory_space<vmem>>, vector<16x1xf32>
    %18 = vector.broadcast %17 : vector<16x1xf32> to vector<16x128xf32>
    %19 = arith.addf %16, %18 : vector<16x128xf32>
    %cst_11 = arith.constant 0.000000e+00 : f32
    %20 = vector.broadcast %cst_11 : f32 to vector<16x128xf32>
    %21 = arith.maximumf %19, %20 : vector<16x128xf32>
    %22 = arith.truncf %21 : vector<16x128xf32> to vector<16x128xbf16>
    %c0_12 = arith.constant 0 : index
    %c0_13 = arith.constant 0 : index
    %23 = vector.load %arg6[%c0_12, %c0_13] : memref<8x16xbf16, #tpu.memory_space<vmem>>, vector<8x16xbf16>
    %cst_14 = arith.constant dense<0.000000e+00> : vector<8x128xf32>
    %24 = tpu.matmul %23, %22, %cst_14 {dimension_numbers = #tpu.dot_dimension_numbers<[1], [0], [0], [1], [0, 0, 1, 1], [], []>} : vector<8x16xbf16>, vector<16x128xbf16>, vector<8x128xf32> -> vector<8x128xf32>
    %c0_15 = arith.constant 0 : index
    %c0_16 = arith.constant 0 : index
    %25 = vector.load %arg7[%c0_15, %c0_16] : memref<8x1xf32, #tpu.memory_space<vmem>>, vector<8x1xf32>
    %26 = vector.broadcast %25 : vector<8x1xf32> to vector<8x128xf32>
    %27 = arith.addf %24, %26 : vector<8x128xf32>
    %cst_17 = arith.constant 0.000000e+00 : f32
    %28 = vector.broadcast %cst_17 : f32 to vector<8x128xf32>
    %29 = arith.maximumf %27, %28 : vector<8x128xf32>
    %30 = arith.truncf %29 : vector<8x128xf32> to vector<8x128xbf16>
    %c0_18 = arith.constant 0 : index
    %c0_19 = arith.constant 0 : index
    %31 = vector.load %arg8[%c0_18, %c0_19] : memref<1x8xbf16, #tpu.memory_space<vmem>>, vector<1x8xbf16>
    %cst_20 = arith.constant dense<0.000000e+00> : vector<1x128xf32>
    %32 = tpu.matmul %31, %30, %cst_20 {dimension_numbers = #tpu.dot_dimension_numbers<[1], [0], [0], [1], [0, 0, 1, 1], [], []>} : vector<1x8xbf16>, vector<8x128xbf16>, vector<1x128xf32> -> vector<1x128xf32>
    %c0_21 = arith.constant 0 : index
    %c0_22 = arith.constant 0 : index
    %33 = vector.load %arg9[%c0_21, %c0_22] : memref<1x1xf32, #tpu.memory_space<vmem>>, vector<1x1xf32>
    %34 = vector.broadcast %33 : vector<1x1xf32> to vector<1x128xf32>
    %35 = arith.addf %32, %34 : vector<1x128xf32>
    %cst_23 = arith.constant 0.000000e+00 : f32
    %36 = vector.broadcast %cst_23 : f32 to vector<1x128xf32>
    %37 = arith.subf %36, %35 : vector<1x128xf32>
    %38 = math.exp %37 : vector<1x128xf32>
    %cst_24 = arith.constant 1.000000e+00 : f32
    %39 = vector.broadcast %cst_24 : f32 to vector<1x128xf32>
    %40 = arith.addf %39, %38 : vector<1x128xf32>
    %41 = tpu.reciprocal %40 {approx = true} : vector<1x128xf32> -> vector<1x128xf32>
    %c0_25 = arith.constant 0 : index
    %c0_26 = arith.constant 0 : index
    %42 = vector.load %arg10[%c0_25, %c0_26] : memref<1x128xf32, #tpu.memory_space<vmem>>, vector<1x128xf32>
    tpu.vector_store %arg10[%c0_25, %c0_26], %41 {strides = array<i32>} : memref<1x128xf32, #tpu.memory_space<vmem>>, vector<1x128xf32>,
    return
  }
  func.func @transform_0(%arg0: i32) -> (i32, i32) {
    %c0_i32 = arith.constant 0 : i32
    %c0_i32_0 = arith.constant 0 : i32
    return %c0_i32, %arg0 : i32, i32
  }
  func.func @transform_1(%arg0: i32) -> (i32, i32) {
    %c0_i32 = arith.constant 0 : i32
    %c0_i32_0 = arith.constant 0 : i32
    %c0_i32_1 = arith.constant 0 : i32
    return %c0_i32, %c0_i32_0 : i32, i32
  }
  func.func @transform_2(%arg0: i32) -> (i32, i32) {
    %c0_i32 = arith.constant 0 : i32
    %c0_i32_0 = arith.constant 0 : i32
    %c0_i32_1 = arith.constant 0 : i32
    return %c0_i32, %c0_i32_0 : i32, i32
  }
  func.func @transform_3(%arg0: i32) -> (i32, i32) {
    %c0_i32 = arith.constant 0 : i32
    %c0_i32_0 = arith.constant 0 : i32
    %c0_i32_1 = arith.constant 0 : i32
    return %c0_i32, %c0_i32_0 : i32, i32
  }
  func.func @transform_4(%arg0: i32) -> (i32, i32) {
    %c0_i32 = arith.constant 0 : i32
    %c0_i32_0 = arith.constant 0 : i32
    %c0_i32_1 = arith.constant 0 : i32
    return %c0_i32, %c0_i32_0 : i32, i32
  }
  func.func @transform_5(%arg0: i32) -> (i32, i32) {
    %c0_i32 = arith.constant 0 : i32
    %c0_i32_0 = arith.constant 0 : i32
    %c0_i32_1 = arith.constant 0 : i32
    return %c0_i32, %c0_i32_0 : i32, i32
  }
  func.func @transform_6(%arg0: i32) -> (i32, i32) {
    %c0_i32 = arith.constant 0 : i32
    %c0_i32_0 = arith.constant 0 : i32
    %c0_i32_1 = arith.constant 0 : i32
    return %c0_i32, %c0_i32_0 : i32, i32
  }
  func.func @transform_7(%arg0: i32) -> (i32, i32) {
    %c0_i32 = arith.constant 0 : i32
    %c0_i32_0 = arith.constant 0 : i32
    %c0_i32_1 = arith.constant 0 : i32
    return %c0_i32, %c0_i32_0 : i32, i32
  }
  func.func @transform_8(%arg0: i32) -> (i32, i32) {
    %c0_i32 = arith.constant 0 : i32
    %c0_i32_0 = arith.constant 0 : i32
    %c0_i32_1 = arith.constant 0 : i32
    return %c0_i32, %c0_i32_0 : i32, i32
  }
  func.func @transform_9(%arg0: i32) -> (i32, i32) {
    %c0_i32 = arith.constant 0 : i32
    %c0_i32_0 = arith.constant 0 : i32
    return %c0_i32, %arg0 : i32, i32
  }
}

</mosaic_0001>

<llo_original>
// kernel: tpu_custom_call.1
$region0: #{tpu_custom_call.1}
  #allocation0 [shape = 'u32[]', space=smem, size = 0x4, offset = 0x4, fixed_abs, tag = 'smem constant byte address 0x4 - core index']
  #allocation1 [shape = 'u32[144,128]{1,0:T(1,128)}', space=vmem, size = 0x12000, scoped, tag = 'internal scratch']
  #allocation2 [shape = 'f32[1,1]{1,0:T(1,128)S(1)}', space=vmem, size = 0x200, scoped, tag = 'scoped memory for tpu_custom_call.1']
  %s0 = inlined_call_operand.vmem [shape: s32[1,128], index: 0, kind: input, shape index: {}]
  %s1 = inlined_call_operand.vmem [shape: bf16[32,64], index: 1, kind: input, shape index: {}]
  %s2 = inlined_call_operand.vmem [shape: f32[32,1], index: 2, kind: input, shape index: {}]
  %s3 = inlined_call_operand.vmem [shape: bf16[16,32], index: 3, kind: input, shape index: {}]
  %s4 = inlined_call_operand.vmem [shape: f32[16,1], index: 4, kind: input, shape index: {}]
  %s5 = inlined_call_operand.vmem [shape: bf16[8,16], index: 5, kind: input, shape index: {}]
  %s6 = inlined_call_operand.vmem [shape: f32[8,1], index: 6, kind: input, shape index: {}]
  %s7 = inlined_call_operand.vmem [shape: bf16[1,8], index: 7, kind: input, shape index: {}]
  %s8 = inlined_call_operand.<no memory space> [shape: f32[1,1], index: 8, kind: input, shape index: {}]
  %s9 = inlined_call_operand.hbm [shape: f32[1,128], index: 9, kind: output, shape index: {}]
  %s10 = sld [smem:[#allocation0]]
  $region46: #{tpu_custom_call.1} parent=0
    _
  %s12 = ssub.s32 1, %s10
  %s13 = scalar_select 0, %s12, %s10
  %v14 = vstv %s8
  %15 = vst [vmem:[#allocation2] sm:$0x1] %v14
  $region1: #{tpu_custom_call.1} parent=0
    #allocation3 [shape = 'u8[512]{0}', space=vmem, size = 0x400, scoped, tag = 'output window, operand 0, single buffered']
    #allocation4 [shape = 's32[1]{0}', space=sflag, size = 0x4, scoped, tag = 'scoped memory for tpu_custom_call.1']
    %16 = vsyncpa [#allocation4], 0
    // Predicated region
    $region2: #{tpu_custom_call.1} parent=1 // pred_check
      _
    $region3: #{tpu_custom_call.1} parent=1 // pred_check_branch
      %18 = sbr.rel (0) target = $region5
    $region4: #{tpu_custom_call.1} parent=1 // pred_region
      _
    $region5: #{tpu_custom_call.1} parent=1 // pred_fallthru
      _
    // Predicated region
    $region6: #{tpu_custom_call.1} parent=1 // pred_check
      _
    $region7: #{tpu_custom_call.1} parent=1 // pred_check_branch
      %20 = sbr.rel (0) target = $region9
    $region8: #{tpu_custom_call.1} parent=1 // pred_region
      _
    $region9: #{tpu_custom_call.1} parent=1 // pred_fallthru
      _
    // Predicated region
    $region10: #{tpu_custom_call.1} parent=1 // pred_check
      _
    $region11: #{tpu_custom_call.1} parent=1 // pred_check_branch
      %22 = sbr.rel (0) target = $region13
    $region12: #{tpu_custom_call.1} parent=1 // pred_region
      _
    $region13: #{tpu_custom_call.1} parent=1 // pred_fallthru
      _
    // Predicated region
    $region14: #{tpu_custom_call.1} parent=1 // pred_check
      _
    $region15: #{tpu_custom_call.1} parent=1 // pred_check_branch
      %24 = sbr.rel (0) target = $region17
    $region16: #{tpu_custom_call.1} parent=1 // pred_region
      _
    $region17: #{tpu_custom_call.1} parent=1 // pred_fallthru
      _
    // Predicated region
    $region18: #{tpu_custom_call.1} parent=1 // pred_check
      _
    $region19: #{tpu_custom_call.1} parent=1 // pred_check_branch
      %26 = sbr.rel (0) target = $region21
    $region20: #{tpu_custom_call.1} parent=1 // pred_region
      _
    $region21: #{tpu_custom_call.1} parent=1 // pred_fallthru
      _
    // Predicated region
    $region22: #{tpu_custom_call.1} parent=1 // pred_check
      _
    $region23: #{tpu_custom_call.1} parent=1 // pred_check_branch
      %28 = sbr.rel (0) target = $region25
    $region24: #{tpu_custom_call.1} parent=1 // pred_region
      _
    $region25: #{tpu_custom_call.1} parent=1 // pred_fallthru
      _
    // Predicated region
    $region26: #{tpu_custom_call.1} parent=1 // pred_check
      _
    $region27: #{tpu_custom_call.1} parent=1 // pred_check_branch
      %30 = sbr.rel (0) target = $region29
    $region28: #{tpu_custom_call.1} parent=1 // pred_region
      _
    $region29: #{tpu_custom_call.1} parent=1 // pred_fallthru
      _
    // Predicated region
    $region30: #{tpu_custom_call.1} parent=1 // pred_check
      _
    $region31: #{tpu_custom_call.1} parent=1 // pred_check_branch
      %32 = sbr.rel (0) target = $region33
    $region32: #{tpu_custom_call.1} parent=1 // pred_region
      _
    $region33: #{tpu_custom_call.1} parent=1 // pred_fallthru
      _
    // Predicated region
    $region34: #{tpu_custom_call.1} parent=1 // pred_check
      _
    $region35: #{tpu_custom_call.1} parent=1 // pred_check_branch
      %34 = sbr.rel (0) target = $region37
    $region36: #{tpu_custom_call.1} parent=1 // pred_region
      _
    $region37: #{tpu_custom_call.1} parent=1 // pred_fallthru
      _
    %v36 = vld [vmem:[%s0] sm:$0x1]
    %v37 = vlaneseq
    %v38 = vshrl.u32 %v37, 7
    %v39 = vadd.s32 %v38, 8
    %v40 = vadd.s32 %v38, 16
    %v41 = vadd.s32 %v38, 24
    %v42 = vadd.s32 %v38, 32
    %v43 = vadd.s32 %v38, 40
    %v44 = vadd.s32 %v38, 48
    %v45 = vadd.s32 %v38, 56
    %v46 = vlaneseq
    %v47 = vshrl.u32 %v46, 7
    %v48 = vsub.s32 0, %v47
    %v49 = vrot.slane %v36, %v48
    %vm50 = vcmp.eq.s32.totalorder %v38, %v49
    %vm51 = vcmp.eq.s32.totalorder %v39, %v49
    %vm52 = vcmp.eq.s32.totalorder %v40, %v49
    %vm53 = vcmp.eq.s32.totalorder %v41, %v49
    %vm54 = vcmp.eq.s32.totalorder %v42, %v49
    %vm55 = vcmp.eq.s32.totalorder %v43, %v49
    %vm56 = vcmp.eq.s32.totalorder %v44, %v49
    %vm57 = vcmp.eq.s32.totalorder %v45, %v49
    %v58 = vsel %vm50, 1, 0
    %v59 = vsel %vm51, 1, 0
    %v60 = vsel %vm52, 1, 0
    %v61 = vsel %vm53, 1, 0
    %v62 = vsel %vm54, 1, 0
    %v63 = vsel %vm55, 1, 0
    %v64 = vsel %vm56, 1, 0
    %v65 = vsel %vm57, 1, 0
    %v66 = vcvt.s32.f32 %v58
    %v67 = vcvt.s32.f32 %v59
    %v68 = vcvt.s32.f32 %v60
    %v69 = vcvt.s32.f32 %v61
    %v70 = vcvt.s32.f32 %v62
    %v71 = vcvt.s32.f32 %v63
    %v72 = vcvt.s32.f32 %v64
    %v73 = vcvt.s32.f32 %v65
    %v74 = vpack.c.bf16 %v67, %v66
    %v75 = vpack.c.bf16 %v69, %v68
    %v76 = vpack.c.bf16 %v71, %v70
    %v77 = vpack.c.bf16 %v73, %v72
    %v78 = vld [vmem:[%s1] sm:$0xf]
    %v79 = vld [vmem:[%s1 + $0x4] sm:$0xf]
    %v80 = vld [vmem:[%s1 + $0x8] sm:$0xf]
    %v81 = vld [vmem:[%s1 + $0xc] sm:$0xf]
    %v82 = vld [vmem:[%s2] sm:$0xff]
    %v83 = vld [vmem:[%s2 + $0x8] sm:$0xff]
    %v84 = vld [vmem:[%s2 + $0x10] sm:$0xff]
    %v85 = vld [vmem:[%s2 + $0x18] sm:$0xff]
    %87 = vset.pattern.permute.xlu0 0
    %88 = vperm.xlu0 %87, %v82
    %v89 = vpop.permute.xlu0 %88
    %92 = vset.pattern.permute.xlu0 0
    %93 = vperm.xlu0 %92, %v83
    %v94 = vpop.permute.xlu0 %93
    %97 = vset.pattern.permute.xlu0 0
    %98 = vperm.xlu0 %97, %v84
    %v99 = vpop.permute.xlu0 %98
    %102 = vset.pattern.permute.xlu0 0
    %103 = vperm.xlu0 %102, %v85
    %v104 = vpop.permute.xlu0 %103
    %v110 = vunpack.c.l.b16 %v78
    %v111 = vunpack.c.l.b16 %v79
    %v112 = vunpack.c.l.b16 %v80
    %v113 = vunpack.c.l.b16 %v81
    %v114 = vpack.c.b16 %v111, %v110
    %v115 = vpack.c.b16 %v113, %v112
    %vm116 = vcmask 523264
    %v118 = vsel %vm116, %v114, 0
    %v121 = vsel %vm116, %v115, 0
    %123 = vmatprep.subr.bf16.mxu0 0
    %124 = vmatpush1.bf16.msra.mxu0 %v74
    %125 = vmatprep.subr.bf16.mxu0 0
    %126 = vmatpush1.bf16.msra.mxu0 %v75
    %127 = vmatprep.subr.bf16.mxu0 0
    %128 = vmatpush1.bf16.msra.mxu0 %v76
    %129 = vmatprep.subr.bf16.mxu0 0
    %130 = vmatpush1.bf16.msra.mxu0 %v77
    %131 = vmatprep.subr.bf16.mxu0 0
    %132 = vmatpush1.bf16.msra.mxu0 0
    %133 = vmatprep.subr.bf16.mxu0 0
    %134 = vmatpush1.bf16.msra.mxu0 0
    %135 = vmatprep.subr.bf16.mxu0 0
    %136 = vmatpush1.bf16.msra.mxu0 0
    %137 = vmatprep.subr.bf16.mxu0 0
    %138 = vmatpush1.bf16.msra.mxu0 0
    %139 = vmatprep.subr.bf16.mxu0 0
    %140 = vmatpush1.bf16.msra.mxu0 0
    %141 = vmatprep.subr.bf16.mxu0 0
    %142 = vmatpush1.bf16.msra.mxu0 0
    %143 = vmatprep.subr.bf16.mxu0 0
    %144 = vmatpush1.bf16.msra.mxu0 0
    %145 = vmatprep.subr.bf16.mxu0 0
    %146 = vmatpush1.bf16.msra.mxu0 0
    %147 = vmatprep.subr.bf16.mxu0 0
    %148 = vmatpush1.bf16.msra.mxu0 0
    %149 = vmatprep.subr.bf16.mxu0 0
    %150 = vmatpush1.bf16.msra.mxu0 0
    %151 = vmatprep.subr.bf16.mxu0 0
    %152 = vmatpush1.bf16.msra.mxu0 0
    %153 = vmatprep.subr.bf16.mxu0 0
    %154 = vmatpush1.bf16.msra.mxu0 0
    %155 = vmatprep.mubr.bf16.mxu0 0
    %156 = vmatmul.mubr.bf16.gmra.mrb[0].mxu0 %v118
    %v157 = vpop.f32.mrb[0].mxu0
    %v158 = vadd.f32 %v89, %v157
    %v159 = vpop.f32.mrb[0].mxu0
    %v160 = vpop.f32.mrb[0].mxu0
    %v161 = vadd.f32 %v94, %v160
    %v162 = vpop.f32.mrb[0].mxu0
    %163 = vmatprep.mubr.bf16.mxu0 0
    %164 = vmatmul.mubr.bf16.gmra.mrb[0].mxu0 %v121
    %v165 = vpop.f32.mrb[0].mxu0
    %v166 = vadd.f32 %v99, %v165
    %v167 = vpop.f32.mrb[0].mxu0
    %v168 = vpop.f32.mrb[0].mxu0
    %v169 = vadd.f32 %v104, %v168
    %v170 = vpop.f32.mrb[0].mxu0
    %171 = vdwg.mxu0
    %v172 = vmax.f32 %v158, 0.0
    %v173 = vmax.f32 %v161, 0.0
    %v174 = vmax.f32 %v166, 0.0
    %v175 = vmax.f32 %v169, 0.0
    %v176 = vpack.c.bf16 %v173, %v172
    %v177 = vpack.c.bf16 %v175, %v174
    %v178 = vld [vmem:[%s3] sm:$0xf]
    %v179 = vld [vmem:[%s3 + $0x4] sm:$0xf]
    %v180 = vld [vmem:[%s4] sm:$0xff]
    %v181 = vld [vmem:[%s4 + $0x8] sm:$0xff]
    %183 = vset.pattern.permute.xlu0 0
    %184 = vperm.xlu0 %183, %v180
    %v185 = vpop.permute.xlu0 %184
    %188 = vset.pattern.permute.xlu0 0
    %189 = vperm.xlu0 %188, %v181
    %v190 = vpop.permute.xlu0 %189
    %v194 = vunpack.c.l.b16 %v178
    %v195 = vunpack.c.l.b16 %v179
    %v196 = vpack.c.b16 %v195, %v194
    %vm197 = vcmask 261120
    %v199 = vsel %vm197, %v196, 0
    %201 = vmatprep.subr.bf16.mxu0 0
    %202 = vmatpush1.bf16.msra.mxu0 %v176
    %203 = vmatprep.subr.bf16.mxu0 0
    %204 = vmatpush1.bf16.msra.mxu0 %v177
    %205 = vmatprep.subr.bf16.mxu0 0
    %206 = vmatpush1.bf16.msra.mxu0 0
    %207 = vmatprep.subr.bf16.mxu0 0
    %208 = vmatpush1.bf16.msra.mxu0 0
    %209 = vmatprep.subr.bf16.mxu0 0
    %210 = vmatpush1.bf16.msra.mxu0 0
    %211 = vmatprep.subr.bf16.mxu0 0
    %212 = vmatpush1.bf16.msra.mxu0 0
    %213 = vmatprep.subr.bf16.mxu0 0
    %214 = vmatpush1.bf16.msra.mxu0 0
    %215 = vmatprep.subr.bf16.mxu0 0
    %216 = vmatpush1.bf16.msra.mxu0 0
    %217 = vmatprep.subr.bf16.mxu0 0
    %218 = vmatpush1.bf16.msra.mxu0 0
    %219 = vmatprep.subr.bf16.mxu0 0
    %220 = vmatpush1.bf16.msra.mxu0 0
    %221 = vmatprep.subr.bf16.mxu0 0
    %222 = vmatpush1.bf16.msra.mxu0 0
    %223 = vmatprep.subr.bf16.mxu0 0
    %224 = vmatpush1.bf16.msra.mxu0 0
    %225 = vmatprep.subr.bf16.mxu0 0
    %226 = vmatpush1.bf16.msra.mxu0 0
    %227 = vmatprep.subr.bf16.mxu0 0
    %228 = vmatpush1.bf16.msra.mxu0 0
    %229 = vmatprep.subr.bf16.mxu0 0
    %230 = vmatpush1.bf16.msra.mxu0 0
    %231 = vmatprep.subr.bf16.mxu0 0
    %232 = vmatpush1.bf16.msra.mxu0 0
    %233 = vmatprep.mubr.bf16.mxu0 0
    %234 = vmatmul.mubr.bf16.gmra.mrb[0].mxu0 %v199
    %v235 = vpop.f32.mrb[0].mxu0
    %v236 = vadd.f32 %v185, %v235
    %v237 = vpop.f32.mrb[0].mxu0
    %v238 = vpop.f32.mrb[0].mxu0
    %v239 = vadd.f32 %v190, %v238
    %v240 = vpop.f32.mrb[0].mxu0
    %241 = vdwg.mxu0
    %v242 = vmax.f32 %v236, 0.0
    %v243 = vmax.f32 %v239, 0.0
    %v244 = vpack.c.bf16 %v243, %v242
    %v245 = vld [vmem:[%s5] sm:$0xf]
    %v246 = vld [vmem:[%s6] sm:$0xff]
    %248 = vset.pattern.permute.xlu0 0
    %249 = vperm.xlu0 %248, %v246
    %v250 = vpop.permute.xlu0 %249
    %vm252 = vcmask 130048
    %v254 = vsel %vm252, %v245, 0
    %256 = vmatprep.subr.bf16.mxu0 0
    %257 = vmatpush1.bf16.msra.mxu0 %v244
    %258 = vmatprep.subr.bf16.mxu0 0
    %259 = vmatpush1.bf16.msra.mxu0 0
    %260 = vmatprep.subr.bf16.mxu0 0
    %261 = vmatpush1.bf16.msra.mxu0 0
    %262 = vmatprep.subr.bf16.mxu0 0
    %263 = vmatpush1.bf16.msra.mxu0 0
    %264 = vmatprep.subr.bf16.mxu0 0
    %265 = vmatpush1.bf16.msra.mxu0 0
    %266 = vmatprep.subr.bf16.mxu0 0
    %267 = vmatpush1.bf16.msra.mxu0 0
    %268 = vmatprep.subr.bf16.mxu0 0
    %269 = vmatpush1.bf16.msra.mxu0 0
    %270 = vmatprep.subr.bf16.mxu0 0
    %271 = vmatpush1.bf16.msra.mxu0 0
    %272 = vmatprep.subr.bf16.mxu0 0
    %273 = vmatpush1.bf16.msra.mxu0 0
    %274 = vmatprep.subr.bf16.mxu0 0
    %275 = vmatpush1.bf16.msra.mxu0 0
    %276 = vmatprep.subr.bf16.mxu0 0
    %277 = vmatpush1.bf16.msra.mxu0 0
    %278 = vmatprep.subr.bf16.mxu0 0
    %279 = vmatpush1.bf16.msra.mxu0 0
    %280 = vmatprep.subr.bf16.mxu0 0
    %281 = vmatpush1.bf16.msra.mxu0 0
    %282 = vmatprep.subr.bf16.mxu0 0
    %283 = vmatpush1.bf16.msra.mxu0 0
    %284 = vmatprep.subr.bf16.mxu0 0
    %285 = vmatpush1.bf16.msra.mxu0 0
    %286 = vmatprep.subr.bf16.mxu0 0
    %287 = vmatpush1.bf16.msra.mxu0 0
    %288 = vmatprep.mubr.bf16.mxu0 0
    %289 = vmatmul.mubr.bf16.gmra.mrb[0].mxu0 %v254
    %v290 = vpop.f32.mrb[0].mxu0
    %v291 = vadd.f32 %v250, %v290
    %v292 = vpop.f32.mrb[0].mxu0
    %v293 = vpop.f32.mrb[0].mxu0
    %v294 = vpop.f32.mrb[0].mxu0
    %295 = vdwg.mxu0
    %v296 = vmax.f32 %v291, 0.0
    %v297 = vpack.c.bf16 %v296, %v296
    %v298 = vld [vmem:[%s7] sm:$0x1]
    %v299 = vld [vmem:[#allocation2] sm:$0x1]
    %301 = vset.pattern.permute.xlu0 0
    %302 = vperm.xlu0 %301, %v299
    %v303 = vpop.permute.xlu0 %302
    %v305 = vlaneseq
    %v306 = vshrl.u32 %v305, 7
    %v307 = vsub.s32 0, %v306
    %v308 = vrot.slane %v303, %v307
    %vm309 = vcmask 64512
    %v311 = vsel %vm309, %v298, 0
    %vm313 = vcmask 1043456
    %v315 = vsel %vm313, %v297, 0
    %317 = vmatprep.subr.bf16.mxu0 0
    %318 = vmatpush1.bf16.msra.mxu0 %v315
    %319 = vmatprep.subr.bf16.mxu0 0
    %320 = vmatpush1.bf16.msra.mxu0 0
    %321 = vmatprep.subr.bf16.mxu0 0
    %322 = vmatpush1.bf16.msra.mxu0 0
    %323 = vmatprep.subr.bf16.mxu0 0
    %324 = vmatpush1.bf16.msra.mxu0 0
    %325 = vmatprep.subr.bf16.mxu0 0
    %326 = vmatpush1.bf16.msra.mxu0 0
    %327 = vmatprep.subr.bf16.mxu0 0
    %328 = vmatpush1.bf16.msra.mxu0 0
    %329 = vmatprep.subr.bf16.mxu0 0
    %330 = vmatpush1.bf16.msra.mxu0 0
    %331 = vmatprep.subr.bf16.mxu0 0
    %332 = vmatpush1.bf16.msra.mxu0 0
    %333 = vmatprep.subr.bf16.mxu0 0
    %334 = vmatpush1.bf16.msra.mxu0 0
    %335 = vmatprep.subr.bf16.mxu0 0
    %336 = vmatpush1.bf16.msra.mxu0 0
    %337 = vmatprep.subr.bf16.mxu0 0
    %338 = vmatpush1.bf16.msra.mxu0 0
    %339 = vmatprep.subr.bf16.mxu0 0
    %340 = vmatpush1.bf16.msra.mxu0 0
    %341 = vmatprep.subr.bf16.mxu0 0
    %342 = vmatpush1.bf16.msra.mxu0 0
    %343 = vmatprep.subr.bf16.mxu0 0
    %344 = vmatpush1.bf16.msra.mxu0 0
    %345 = vmatprep.subr.bf16.mxu0 0
    %346 = vmatpush1.bf16.msra.mxu0 0
    %347 = vmatprep.subr.bf16.mxu0 0
    %348 = vmatpush1.bf16.msra.mxu0 0
    %349 = vmatprep.mubr.bf16.mxu0 0
    %350 = vmatmul.mubr.bf16.gmra.mrb[0].mxu0 %v311
    %v351 = vpop.f32.mrb[0].mxu0
    %v352 = vadd.f32 %v308, %v351
    %v353 = vpop.f32.mrb[0].mxu0
    %v354 = vpop.f32.mrb[0].mxu0
    %v355 = vpop.f32.mrb[0].mxu0
    %356 = vdwg.mxu0
    %v357 = vsub.f32 0.0, %v352
    %v358 = vmul.f32 %v357, 1.442695
    %v359 = vpow.pop %v358
    %v360 = vadd.f32 %v359, 1.0
    %v361 = vrcp.pop %v360
    %362 = vst [vmem:[#allocation3] sm:$0x1] %v361
    // Predicated region
    $region38: #{tpu_custom_call.1} parent=1 // pred_check
      _
    $region39: #{tpu_custom_call.1} parent=1 // pred_check_branch
      %364 = sbr.rel (0) target = $region41
    $region40: #{tpu_custom_call.1} parent=1 // pred_region
      %s366 = ssub.s32 16, 16
      %367 = vsyncadd [#allocation4], %s366
      %s369 = sshll.u32 [#allocation3], 4
      %s370 = int_to_ptr.vmem [resolvable:$true] %s369
      %372 = dma.vmem_to_hbm [thread:$0]  %s370, 16, %s9, [#allocation4]
    $region41: #{tpu_custom_call.1} parent=1 // pred_fallthru
      _
    // Predicated region
    $region42: #{tpu_custom_call.1} parent=1 // pred_check
      _
    $region43: #{tpu_custom_call.1} parent=1 // pred_check_branch
      %374 = sbr.rel (0) target = $region45
    $region44: #{tpu_custom_call.1} parent=1 // pred_region
      %375 = dma.done [#allocation4], 16
    $region45: #{tpu_custom_call.1} parent=1 // pred_fallthru
      _
    %376 = vsyncpa [#allocation4], 1

</llo_original>
